<compile_context>
chip_gen: v7x
topology: tpu7x:2x2x1
jax: 0.10.0
libtpu: 0.0.40
codegen_flags: <defaults>
</compile_context>

<pallas_src>
import jax
import jax.numpy as jnp
from jax.experimental import pallas as pl
from jax.experimental.pallas import tpu as pltpu


def cheb_encoder_kernel(x_ref, w1_ref, b1_ref, w2_ref, b2_ref, o_ref):
    # x_ref:  (N, E) f32   node features (embedding table)
    # w1_ref: (E, H) f32   conv1 weight (already W^T relative to torch lin)
    # b1_ref: (1, H) f32
    # w2_ref: (H, H) f32   conv2 weight
    # b2_ref: (1, H) f32
    # o_ref:  (N, H) f32
    x = x_ref[...].astype(jnp.bfloat16)
    w1 = w1_ref[...].astype(jnp.bfloat16)

    # conv1 (ChebConv K=1 == linear) + bias + ReLU, f32 accumulation.
    h = jnp.dot(x, w1, preferred_element_type=jnp.float32)
    h = jnp.maximum(h + b1_ref[...], 0.0)

    # TODO(synk): dropout is identity in eval mode (args.training=False);
    # training-mode dropout would use pltpu.prng_seed + pltpu.prng_random_bits.

    # conv2 (ChebConv K=1 == linear) + bias.
    h = h.astype(jnp.bfloat16)
    w2 = w2_ref[...].astype(jnp.bfloat16)
    out = jnp.dot(h, w2, preferred_element_type=jnp.float32)
    o_ref[...] = out + b2_ref[...]


def cheb_encoder(x, w1, b1, w2, b2):
    """x: (n_nodes, n_embed); w1: (n_embed, n_hidden); w2: (n_hidden, n_hidden);
    b1/b2: (1, n_hidden).  Returns (n_nodes, n_hidden) float32."""
    n_nodes, n_embed = x.shape
    n_hidden = w1.shape[1]

    vmem = pl.BlockSpec(memory_space=pltpu.MemorySpace.VMEM)
    return pl.pallas_call(
        cheb_encoder_kernel,
        out_shape=jax.ShapeDtypeStruct((n_nodes, n_hidden), jnp.float32),
        in_specs=[vmem, vmem, vmem, vmem, vmem],
        out_specs=vmem,
    )(
        x.astype(jnp.float32),
        w1.astype(jnp.float32),
        b1.reshape(1, n_hidden).astype(jnp.float32),
        w2.astype(jnp.float32),
        b2.reshape(1, n_hidden).astype(jnp.float32),
    )


def reference_f32(x, w1, b1, w2, b2):
    h = jnp.maximum(x @ w1 + b1, 0.0)
    return h @ w2 + b2


def reference_bf16(x, w1, b1, w2, b2):
    # Mirrors the kernel's numerics: bf16 operands, f32 accumulation/bias.
    xb, w1b, w2b = (a.astype(jnp.bfloat16) for a in (x, w1, w2))
    h = jnp.maximum(jnp.dot(xb, w1b, preferred_element_type=jnp.float32) + b1, 0.0)
    return jnp.dot(h.astype(jnp.bfloat16), w2b,
                   preferred_element_type=jnp.float32) + b2


if __name__ == "__main__":
    # Small shapes implied by the module: n_nodes nodes with n_embed embedding
    # features each, two Cheb(K=1) layers mapping n_embed -> n_hidden -> n_hidden.
    n_nodes, n_embed, n_hidden = 128, 32, 32

    key = jax.random.PRNGKey(0)
    k_emb, k_w1, k_b1, k_w2, k_b2, k_edge = jax.random.split(key, 6)

    # forward() consumes self.embedding.weight directly, so the embedding table
    # is the input node-feature matrix.
    emb_weight = jax.random.normal(k_emb, (n_nodes, n_embed), jnp.float32)
    w1 = jax.random.normal(k_w1, (n_embed, n_hidden), jnp.float32) * 0.1
    b1 = jax.random.normal(k_b1, (1, n_hidden), jnp.float32) * 0.1
    w2 = jax.random.normal(k_w2, (n_hidden, n_hidden), jnp.float32) * 0.1
    b2 = jax.random.normal(k_b2, (1, n_hidden), jnp.float32) * 0.1

    # prop_edge_index exists in the PyTorch signature but has no effect for K=1.
    prop_edge_index = jax.random.randint(k_edge, (2, 256), 0, n_nodes)
    del prop_edge_index  # unused (ChebConv K=1 applies no propagation)

    fwd = jax.jit(cheb_encoder)
    out = fwd(emb_weight, w1, b1, w2, b2)
    out = jax.block_until_ready(out)

    assert out.shape == (n_nodes, n_hidden)
    # Tight check against a reference with identical (bf16-operand) numerics.
    ref_bf16 = reference_bf16(emb_weight, w1, b1, w2, b2)
    assert jnp.allclose(out, ref_bf16, atol=2e-3, rtol=2e-3)
    # Looser check against the pure-f32 reference (module semantics).
    ref_f32 = reference_f32(emb_weight, w1, b1, w2, b2)
    assert jnp.allclose(out, ref_f32, atol=5e-2, rtol=5e-2)

    print("KERNEL_OK")
</pallas_src>

<mosaic_0001>
module attributes {stable_mosaic.version = 11 : i64} {
  func.func @cheb_encoder_kernel(%arg0: memref<128x32xf32, #tpu.memory_space<vmem>>, %arg1: memref<32x32xf32, #tpu.memory_space<vmem>>, %arg2: memref<1x32xf32, #tpu.memory_space<vmem>>, %arg3: memref<32x32xf32, #tpu.memory_space<vmem>>, %arg4: memref<1x32xf32, #tpu.memory_space<vmem>>, %arg5: memref<128x32xf32, #tpu.memory_space<vmem>>) attributes {dimension_semantics = [], scalar_prefetch = 0 : i64, scratch_operands = 0 : i64, tpu.core_type = #tpu.core_type<tc>} {
    %c0 = arith.constant 0 : index
    %c0_0 = arith.constant 0 : index
    %0 = vector.load %arg0[%c0, %c0_0] : memref<128x32xf32, #tpu.memory_space<vmem>>, vector<128x32xf32>
    %1 = arith.truncf %0 : vector<128x32xf32> to vector<128x32xbf16>
    %c0_1 = arith.constant 0 : index
    %c0_2 = arith.constant 0 : index
    %2 = vector.load %arg1[%c0_1, %c0_2] : memref<32x32xf32, #tpu.memory_space<vmem>>, vector<32x32xf32>
    %3 = arith.truncf %2 : vector<32x32xf32> to vector<32x32xbf16>
    %cst = arith.constant dense<0.000000e+00> : vector<128x32xf32>
    %4 = tpu.matmul %1, %3, %cst {dimension_numbers = #tpu.dot_dimension_numbers<[1], [0], [0], [1], [0, 0, 1, 1], [], []>} : vector<128x32xbf16>, vector<32x32xbf16>, vector<128x32xf32> -> vector<128x32xf32>
    %c0_3 = arith.constant 0 : index
    %c0_4 = arith.constant 0 : index
    %5 = vector.load %arg2[%c0_3, %c0_4] : memref<1x32xf32, #tpu.memory_space<vmem>>, vector<1x32xf32>
    %6 = vector.broadcast %5 : vector<1x32xf32> to vector<128x32xf32>
    %7 = arith.addf %4, %6 : vector<128x32xf32>
    %cst_5 = arith.constant 0.000000e+00 : f32
    %8 = vector.broadcast %cst_5 : f32 to vector<128x32xf32>
    %9 = arith.maximumf %7, %8 : vector<128x32xf32>
    %10 = arith.truncf %9 : vector<128x32xf32> to vector<128x32xbf16>
    %c0_6 = arith.constant 0 : index
    %c0_7 = arith.constant 0 : index
    %11 = vector.load %arg3[%c0_6, %c0_7] : memref<32x32xf32, #tpu.memory_space<vmem>>, vector<32x32xf32>
    %12 = arith.truncf %11 : vector<32x32xf32> to vector<32x32xbf16>
    %cst_8 = arith.constant dense<0.000000e+00> : vector<128x32xf32>
    %13 = tpu.matmul %10, %12, %cst_8 {dimension_numbers = #tpu.dot_dimension_numbers<[1], [0], [0], [1], [0, 0, 1, 1], [], []>} : vector<128x32xbf16>, vector<32x32xbf16>, vector<128x32xf32> -> vector<128x32xf32>
    %c0_9 = arith.constant 0 : index
    %c0_10 = arith.constant 0 : index
    %14 = vector.load %arg4[%c0_9, %c0_10] : memref<1x32xf32, #tpu.memory_space<vmem>>, vector<1x32xf32>
    %15 = vector.broadcast %14 : vector<1x32xf32> to vector<128x32xf32>
    %16 = arith.addf %13, %15 : vector<128x32xf32>
    %c0_11 = arith.constant 0 : index
    %c0_12 = arith.constant 0 : index
    %17 = vector.load %arg5[%c0_11, %c0_12] : memref<128x32xf32, #tpu.memory_space<vmem>>, vector<128x32xf32>
    tpu.vector_store %arg5[%c0_11, %c0_12], %16 {strides = array<i32>} : memref<128x32xf32, #tpu.memory_space<vmem>>, vector<128x32xf32>,
    return
  }
}

</mosaic_0001>

<llo_original>
// kernel: cheb_encoder.1
$region0: #{cheb_encoder.1}
  #allocation0 [shape = 'u32[]', space=smem, size = 0x4, offset = 0x4, fixed_abs, tag = 'smem constant byte address 0x4 - core index']
  #allocation1 [shape = 'u32[144,128]{1,0:T(1,128)}', space=vmem, size = 0x12000, scoped, tag = 'internal scratch']
  %s0 = inlined_call_operand.vmem [shape: f32[128,32], index: 0, kind: input, shape index: {}]
  %s1 = inlined_call_operand.vmem [shape: f32[32,32], index: 1, kind: input, shape index: {}]
  %s2 = inlined_call_operand.vmem [shape: f32[1,32], index: 2, kind: input, shape index: {}]
  %s3 = inlined_call_operand.vmem [shape: f32[32,32], index: 3, kind: input, shape index: {}]
  %s4 = inlined_call_operand.vmem [shape: f32[1,32], index: 4, kind: input, shape index: {}]
  %s5 = inlined_call_operand.vmem [shape: f32[128,32], index: 5, kind: output, shape index: {}]
  %s6 = sld [smem:[#allocation0]]
  $region30: #{cheb_encoder.1} parent=0
    _
  %s8 = ssub.s32 1, %s6
  %s9 = scalar_select 0, %s8, %s6
  // Predicated region
  $region2: #{cheb_encoder.1} parent=0 // pred_check
    _
  $region3: #{cheb_encoder.1} parent=0 // pred_check_branch
    %11 = sbr.rel (0) target = $region5
  $region4: #{cheb_encoder.1} parent=0 // pred_region
    _
  $region5: #{cheb_encoder.1} parent=0 // pred_fallthru
    _
  // Predicated region
  $region6: #{cheb_encoder.1} parent=0 // pred_check
    _
  $region7: #{cheb_encoder.1} parent=0 // pred_check_branch
    %13 = sbr.rel (0) target = $region9
  $region8: #{cheb_encoder.1} parent=0 // pred_region
    _
  $region9: #{cheb_encoder.1} parent=0 // pred_fallthru
    _
  // Predicated region
  $region10: #{cheb_encoder.1} parent=0 // pred_check
    _
  $region11: #{cheb_encoder.1} parent=0 // pred_check_branch
    %15 = sbr.rel (0) target = $region13
  $region12: #{cheb_encoder.1} parent=0 // pred_region
    _
  $region13: #{cheb_encoder.1} parent=0 // pred_fallthru
    _
  // Predicated region
  $region14: #{cheb_encoder.1} parent=0 // pred_check
    _
  $region15: #{cheb_encoder.1} parent=0 // pred_check_branch
    %17 = sbr.rel (0) target = $region17
  $region16: #{cheb_encoder.1} parent=0 // pred_region
    _
  $region17: #{cheb_encoder.1} parent=0 // pred_fallthru
    _
  // Predicated region
  $region18: #{cheb_encoder.1} parent=0 // pred_check
    _
  $region19: #{cheb_encoder.1} parent=0 // pred_check_branch
    %19 = sbr.rel (0) target = $region21
  $region20: #{cheb_encoder.1} parent=0 // pred_region
    _
  $region21: #{cheb_encoder.1} parent=0 // pred_fallthru
    _
  %v21 = vld [vmem:[%s0] sm:$0xff]
  %v22 = vld [vmem:[%s0 + $0x8] sm:$0xff]
  %v23 = vld [vmem:[%s0 + $0x10] sm:$0xff]
  %v24 = vld [vmem:[%s0 + $0x18] sm:$0xff]
  %v25 = vld [vmem:[%s0 + $0x20] sm:$0xff]
  %v26 = vld [vmem:[%s0 + $0x28] sm:$0xff]
  %v27 = vld [vmem:[%s0 + $0x30] sm:$0xff]
  %v28 = vld [vmem:[%s0 + $0x38] sm:$0xff]
  %v29 = vld [vmem:[%s0 + $0x40] sm:$0xff]
  %v30 = vld [vmem:[%s0 + $0x48] sm:$0xff]
  %v31 = vld [vmem:[%s0 + $0x50] sm:$0xff]
  %v32 = vld [vmem:[%s0 + $0x58] sm:$0xff]
  %v33 = vld [vmem:[%s0 + $0x60] sm:$0xff]
  %v34 = vld [vmem:[%s0 + $0x68] sm:$0xff]
  %v35 = vld [vmem:[%s0 + $0x70] sm:$0xff]
  %v36 = vld [vmem:[%s0 + $0x78] sm:$0xff]
  %v37 = vpack.c.bf16 %v22, %v21
  %v38 = vpack.c.bf16 %v24, %v23
  %v39 = vpack.c.bf16 %v26, %v25
  %v40 = vpack.c.bf16 %v28, %v27
  %v41 = vpack.c.bf16 %v30, %v29
  %v42 = vpack.c.bf16 %v32, %v31
  %v43 = vpack.c.bf16 %v34, %v33
  %v44 = vpack.c.bf16 %v36, %v35
  %v45 = vld [vmem:[%s1] sm:$0xff]
  %v46 = vld [vmem:[%s1 + $0x8] sm:$0xff]
  %v47 = vld [vmem:[%s1 + $0x10] sm:$0xff]
  %v48 = vld [vmem:[%s1 + $0x18] sm:$0xff]
  %v49 = vpack.c.bf16 %v46, %v45
  %v50 = vpack.c.bf16 %v48, %v47
  %v51 = vld [vmem:[%s2] sm:$0x1]
  %v53 = vlaneseq
  %v54 = vshrl.u32 %v53, 7
  %v55 = vsub.s32 0, %v54
  %v56 = vrot.slane %v51, %v55
  %vm58 = vcmask 261120
  %v60 = vsel %vm58, %v37, 0
  %v63 = vsel %vm58, %v38, 0
  %v66 = vsel %vm58, %v39, 0
  %v69 = vsel %vm58, %v40, 0
  %v72 = vsel %vm58, %v41, 0
  %v75 = vsel %vm58, %v42, 0
  %v78 = vsel %vm58, %v43, 0
  %v81 = vsel %vm58, %v44, 0
  %83 = vmatprep.subr.bf16.mxu0 0
  %84 = vmatpush1.bf16.msra.mxu0 %v49
  %85 = vmatprep.subr.bf16.mxu0 0
  %86 = vmatpush1.bf16.msra.mxu0 %v50
  %87 = vmatprep.subr.bf16.mxu0 0
  %88 = vmatpush1.bf16.msra.mxu0 0
  %89 = vmatprep.subr.bf16.mxu0 0
  %90 = vmatpush1.bf16.msra.mxu0 0
  %91 = vmatprep.subr.bf16.mxu0 0
  %92 = vmatpush1.bf16.msra.mxu0 0
  %93 = vmatprep.subr.bf16.mxu0 0
  %94 = vmatpush1.bf16.msra.mxu0 0
  %95 = vmatprep.subr.bf16.mxu0 0
  %96 = vmatpush1.bf16.msra.mxu0 0
  %97 = vmatprep.subr.bf16.mxu0 0
  %98 = vmatpush1.bf16.msra.mxu0 0
  %99 = vmatprep.subr.bf16.mxu0 0
  %100 = vmatpush1.bf16.msra.mxu0 0
  %101 = vmatprep.subr.bf16.mxu0 0
  %102 = vmatpush1.bf16.msra.mxu0 0
  %103 = vmatprep.subr.bf16.mxu0 0
  %104 = vmatpush1.bf16.msra.mxu0 0
  %105 = vmatprep.subr.bf16.mxu0 0
  %106 = vmatpush1.bf16.msra.mxu0 0
  %107 = vmatprep.subr.bf16.mxu0 0
  %108 = vmatpush1.bf16.msra.mxu0 0
  %109 = vmatprep.subr.bf16.mxu0 0
  %110 = vmatpush1.bf16.msra.mxu0 0
  %111 = vmatprep.subr.bf16.mxu0 0
  %112 = vmatpush1.bf16.msra.mxu0 0
  %113 = vmatprep.subr.bf16.mxu0 0
  %114 = vmatpush1.bf16.msra.mxu0 0
  %115 = vmatprep.mubr.bf16.mxu0 0
  %116 = vmatmul.mubr.bf16.gmra.mrb[0].mxu0 %v60
  %v117 = vpop.f32.mrb[0].mxu0
  %v118 = vadd.f32 %v56, %v117
  %v119 = vpop.f32.mrb[0].mxu0
  %v120 = vpop.f32.mrb[0].mxu0
  %v121 = vadd.f32 %v56, %v120
  %v122 = vpop.f32.mrb[0].mxu0
  %123 = vmatprep.mubr.bf16.mxu0 0
  %124 = vmatmul.mubr.bf16.gmra.mrb[0].mxu0 %v63
  %v125 = vpop.f32.mrb[0].mxu0
  %v126 = vadd.f32 %v56, %v125
  %v127 = vpop.f32.mrb[0].mxu0
  %v128 = vpop.f32.mrb[0].mxu0
  %v129 = vadd.f32 %v56, %v128
  %v130 = vpop.f32.mrb[0].mxu0
  %131 = vmatprep.mubr.bf16.mxu0 0
  %132 = vmatmul.mubr.bf16.gmra.mrb[0].mxu0 %v66
  %v133 = vpop.f32.mrb[0].mxu0
  %v134 = vadd.f32 %v56, %v133
  %v135 = vpop.f32.mrb[0].mxu0
  %v136 = vpop.f32.mrb[0].mxu0
  %v137 = vadd.f32 %v56, %v136
  %v138 = vpop.f32.mrb[0].mxu0
  %139 = vmatprep.mubr.bf16.mxu0 0
  %140 = vmatmul.mubr.bf16.gmra.mrb[0].mxu0 %v69
  %v141 = vpop.f32.mrb[0].mxu0
  %v142 = vadd.f32 %v56, %v141
  %v143 = vpop.f32.mrb[0].mxu0
  %v144 = vpop.f32.mrb[0].mxu0
  %v145 = vadd.f32 %v56, %v144
  %v146 = vpop.f32.mrb[0].mxu0
  %147 = vmatprep.mubr.bf16.mxu0 0
  %148 = vmatmul.mubr.bf16.gmra.mrb[0].mxu0 %v72
  %v149 = vpop.f32.mrb[0].mxu0
  %v150 = vadd.f32 %v56, %v149
  %v151 = vpop.f32.mrb[0].mxu0
  %v152 = vpop.f32.mrb[0].mxu0
  %v153 = vadd.f32 %v56, %v152
  %v154 = vpop.f32.mrb[0].mxu0
  %155 = vmatprep.mubr.bf16.mxu0 0
  %156 = vmatmul.mubr.bf16.gmra.mrb[0].mxu0 %v75
  %v157 = vpop.f32.mrb[0].mxu0
  %v158 = vadd.f32 %v56, %v157
  %v159 = vpop.f32.mrb[0].mxu0
  %v160 = vpop.f32.mrb[0].mxu0
  %v161 = vadd.f32 %v56, %v160
  %v162 = vpop.f32.mrb[0].mxu0
  %163 = vmatprep.mubr.bf16.mxu0 0
  %164 = vmatmul.mubr.bf16.gmra.mrb[0].mxu0 %v78
  %v165 = vpop.f32.mrb[0].mxu0
  %v166 = vadd.f32 %v56, %v165
  %v167 = vpop.f32.mrb[0].mxu0
  %v168 = vpop.f32.mrb[0].mxu0
  %v169 = vadd.f32 %v56, %v168
  %v170 = vpop.f32.mrb[0].mxu0
  %171 = vmatprep.mubr.bf16.mxu0 0
  %172 = vmatmul.mubr.bf16.gmra.mrb[0].mxu0 %v81
  %v173 = vpop.f32.mrb[0].mxu0
  %v174 = vadd.f32 %v56, %v173
  %v175 = vpop.f32.mrb[0].mxu0
  %v176 = vpop.f32.mrb[0].mxu0
  %v177 = vadd.f32 %v56, %v176
  %v178 = vpop.f32.mrb[0].mxu0
  %179 = vdwg.mxu0
  %v180 = vmax.f32 %v118, 0.0
  %v181 = vmax.f32 %v121, 0.0
  %v182 = vmax.f32 %v126, 0.0
  %v183 = vmax.f32 %v129, 0.0
  %v184 = vmax.f32 %v134, 0.0
  %v185 = vmax.f32 %v137, 0.0
  %v186 = vmax.f32 %v142, 0.0
  %v187 = vmax.f32 %v145, 0.0
  %v188 = vmax.f32 %v150, 0.0
  %v189 = vmax.f32 %v153, 0.0
  %v190 = vmax.f32 %v158, 0.0
  %v191 = vmax.f32 %v161, 0.0
  %v192 = vmax.f32 %v166, 0.0
  %v193 = vmax.f32 %v169, 0.0
  %v194 = vmax.f32 %v174, 0.0
  %v195 = vmax.f32 %v177, 0.0
  %v196 = vpack.c.bf16 %v181, %v180
  %v197 = vpack.c.bf16 %v183, %v182
  %v198 = vpack.c.bf16 %v185, %v184
  %v199 = vpack.c.bf16 %v187, %v186
  %v200 = vpack.c.bf16 %v189, %v188
  %v201 = vpack.c.bf16 %v191, %v190
  %v202 = vpack.c.bf16 %v193, %v192
  %v203 = vpack.c.bf16 %v195, %v194
  %v204 = vld [vmem:[%s3] sm:$0xff]
  %v205 = vld [vmem:[%s3 + $0x8] sm:$0xff]
  %v206 = vld [vmem:[%s3 + $0x10] sm:$0xff]
  %v207 = vld [vmem:[%s3 + $0x18] sm:$0xff]
  %v208 = vpack.c.bf16 %v205, %v204
  %v209 = vpack.c.bf16 %v207, %v206
  %v210 = vld [vmem:[%s4] sm:$0x1]
  %v212 = vlaneseq
  %v213 = vshrl.u32 %v212, 7
  %v214 = vsub.s32 0, %v213
  %v215 = vrot.slane %v210, %v214
  %v218 = vsel %vm58, %v196, 0
  %v221 = vsel %vm58, %v197, 0
  %v224 = vsel %vm58, %v198, 0
  %v227 = vsel %vm58, %v199, 0
  %v230 = vsel %vm58, %v200, 0
  %v233 = vsel %vm58, %v201, 0
  %v236 = vsel %vm58, %v202, 0
  %v239 = vsel %vm58, %v203, 0
  %241 = vmatprep.subr.bf16.mxu0 0
  %242 = vmatpush1.bf16.msra.mxu0 %v208
  %243 = vmatprep.subr.bf16.mxu0 0
  %244 = vmatpush1.bf16.msra.mxu0 %v209
  %245 = vmatprep.subr.bf16.mxu0 0
  %246 = vmatpush1.bf16.msra.mxu0 0
  %247 = vmatprep.subr.bf16.mxu0 0
  %248 = vmatpush1.bf16.msra.mxu0 0
  %249 = vmatprep.subr.bf16.mxu0 0
  %250 = vmatpush1.bf16.msra.mxu0 0
  %251 = vmatprep.subr.bf16.mxu0 0
  %252 = vmatpush1.bf16.msra.mxu0 0
  %253 = vmatprep.subr.bf16.mxu0 0
  %254 = vmatpush1.bf16.msra.mxu0 0
  %255 = vmatprep.subr.bf16.mxu0 0
  %256 = vmatpush1.bf16.msra.mxu0 0
  %257 = vmatprep.subr.bf16.mxu0 0
  %258 = vmatpush1.bf16.msra.mxu0 0
  %259 = vmatprep.subr.bf16.mxu0 0
  %260 = vmatpush1.bf16.msra.mxu0 0
  %261 = vmatprep.subr.bf16.mxu0 0
  %262 = vmatpush1.bf16.msra.mxu0 0
  %263 = vmatprep.subr.bf16.mxu0 0
  %264 = vmatpush1.bf16.msra.mxu0 0
  %265 = vmatprep.subr.bf16.mxu0 0
  %266 = vmatpush1.bf16.msra.mxu0 0
  %267 = vmatprep.subr.bf16.mxu0 0
  %268 = vmatpush1.bf16.msra.mxu0 0
  %269 = vmatprep.subr.bf16.mxu0 0
  %270 = vmatpush1.bf16.msra.mxu0 0
  %271 = vmatprep.subr.bf16.mxu0 0
  %272 = vmatpush1.bf16.msra.mxu0 0
  %273 = vmatprep.mubr.bf16.mxu0 0
  %274 = vmatmul.mubr.bf16.gmra.mrb[0].mxu0 %v218
  %v275 = vpop.f32.mrb[0].mxu0
  %v276 = vadd.f32 %v215, %v275
  %v277 = vpop.f32.mrb[0].mxu0
  %v278 = vpop.f32.mrb[0].mxu0
  %v279 = vadd.f32 %v215, %v278
  %v280 = vpop.f32.mrb[0].mxu0
  %281 = vmatprep.mubr.bf16.mxu0 0
  %282 = vmatmul.mubr.bf16.gmra.mrb[0].mxu0 %v221
  %v283 = vpop.f32.mrb[0].mxu0
  %v284 = vadd.f32 %v215, %v283
  %v285 = vpop.f32.mrb[0].mxu0
  %v286 = vpop.f32.mrb[0].mxu0
  %v287 = vadd.f32 %v215, %v286
  %v288 = vpop.f32.mrb[0].mxu0
  %289 = vmatprep.mubr.bf16.mxu0 0
  %290 = vmatmul.mubr.bf16.gmra.mrb[0].mxu0 %v224
  %v291 = vpop.f32.mrb[0].mxu0
  %v292 = vadd.f32 %v215, %v291
  %v293 = vpop.f32.mrb[0].mxu0
  %v294 = vpop.f32.mrb[0].mxu0
  %v295 = vadd.f32 %v215, %v294
  %v296 = vpop.f32.mrb[0].mxu0
  %297 = vmatprep.mubr.bf16.mxu0 0
  %298 = vmatmul.mubr.bf16.gmra.mrb[0].mxu0 %v227
  %v299 = vpop.f32.mrb[0].mxu0
  %v300 = vadd.f32 %v215, %v299
  %v301 = vpop.f32.mrb[0].mxu0
  %v302 = vpop.f32.mrb[0].mxu0
  %v303 = vadd.f32 %v215, %v302
  %v304 = vpop.f32.mrb[0].mxu0
  %305 = vmatprep.mubr.bf16.mxu0 0
  %306 = vmatmul.mubr.bf16.gmra.mrb[0].mxu0 %v230
  %v307 = vpop.f32.mrb[0].mxu0
  %v308 = vadd.f32 %v215, %v307
  %v309 = vpop.f32.mrb[0].mxu0
  %v310 = vpop.f32.mrb[0].mxu0
  %v311 = vadd.f32 %v215, %v310
  %v312 = vpop.f32.mrb[0].mxu0
  %313 = vmatprep.mubr.bf16.mxu0 0
  %314 = vmatmul.mubr.bf16.gmra.mrb[0].mxu0 %v233
  %v315 = vpop.f32.mrb[0].mxu0
  %v316 = vadd.f32 %v215, %v315
  %v317 = vpop.f32.mrb[0].mxu0
  %v318 = vpop.f32.mrb[0].mxu0
  %v319 = vadd.f32 %v215, %v318
  %v320 = vpop.f32.mrb[0].mxu0
  %321 = vmatprep.mubr.bf16.mxu0 0
  %322 = vmatmul.mubr.bf16.gmra.mrb[0].mxu0 %v236
  %v323 = vpop.f32.mrb[0].mxu0
  %v324 = vadd.f32 %v215, %v323
  %v325 = vpop.f32.mrb[0].mxu0
  %v326 = vpop.f32.mrb[0].mxu0
  %v327 = vadd.f32 %v215, %v326
  %v328 = vpop.f32.mrb[0].mxu0
  %329 = vmatprep.mubr.bf16.mxu0 0
  %330 = vmatmul.mubr.bf16.gmra.mrb[0].mxu0 %v239
  %v331 = vpop.f32.mrb[0].mxu0
  %v332 = vadd.f32 %v215, %v331
  %v333 = vpop.f32.mrb[0].mxu0
  %v334 = vpop.f32.mrb[0].mxu0
  %v335 = vadd.f32 %v215, %v334
  %v336 = vpop.f32.mrb[0].mxu0
  %337 = vdwg.mxu0
  %338 = vst.msk [vmem:[%s5] sm:$0xff] %vm58, %v276
  %339 = vst.msk [vmem:[%s5 + $0x8] sm:$0xff] %vm58, %v279
  %340 = vst.msk [vmem:[%s5 + $0x10] sm:$0xff] %vm58, %v284
  %341 = vst.msk [vmem:[%s5 + $0x18] sm:$0xff] %vm58, %v287
  %342 = vst.msk [vmem:[%s5 + $0x20] sm:$0xff] %vm58, %v292
  %343 = vst.msk [vmem:[%s5 + $0x28] sm:$0xff] %vm58, %v295
  %344 = vst.msk [vmem:[%s5 + $0x30] sm:$0xff] %vm58, %v300
  %345 = vst.msk [vmem:[%s5 + $0x38] sm:$0xff] %vm58, %v303
  %346 = vst.msk [vmem:[%s5 + $0x40] sm:$0xff] %vm58, %v308
  %347 = vst.msk [vmem:[%s5 + $0x48] sm:$0xff] %vm58, %v311
  %348 = vst.msk [vmem:[%s5 + $0x50] sm:$0xff] %vm58, %v316
  %349 = vst.msk [vmem:[%s5 + $0x58] sm:$0xff] %vm58, %v319
  %350 = vst.msk [vmem:[%s5 + $0x60] sm:$0xff] %vm58, %v324
  %351 = vst.msk [vmem:[%s5 + $0x68] sm:$0xff] %vm58, %v327
  %352 = vst.msk [vmem:[%s5 + $0x70] sm:$0xff] %vm58, %v332
  %353 = vst.msk [vmem:[%s5 + $0x78] sm:$0xff] %vm58, %v335
  // Predicated region
  $region22: #{cheb_encoder.1} parent=0 // pred_check
    _
  $region23: #{cheb_encoder.1} parent=0 // pred_check_branch
    %355 = sbr.rel (0) target = $region25
  $region24: #{cheb_encoder.1} parent=0 // pred_region
    _
  $region25: #{cheb_encoder.1} parent=0 // pred_fallthru
    _
  // Predicated region
  $region26: #{cheb_encoder.1} parent=0 // pred_check
    _
  $region27: #{cheb_encoder.1} parent=0 // pred_check_branch
    %357 = sbr.rel (0) target = $region29
  $region28: #{cheb_encoder.1} parent=0 // pred_region
    _
  $region29: #{cheb_encoder.1} parent=0 // pred_fallthru
    _

</llo_original>
